<compile_context>
chip_gen: v7x
topology: tpu7x:2x2x1
jax: 0.10.0
libtpu: 0.0.40
codegen_flags: <defaults>
</compile_context>

<pallas_src>
import jax
import jax.numpy as jnp
from jax import lax
from jax.experimental import pallas as pl
from jax.experimental.pallas import tpu as pltpu


def _pick_tile(m, candidates=(512, 256, 128, 64, 16, 8)):
    for t in candidates:
        if m % t == 0:
            return t
    return m  # full extent fallback (always legal for BlockSpec)


def _make_prep_kernel(sqrt_inv_t, out_dtype):
    """Normalize z_i / z_j, scale by sqrt(1/T), emit positive & diagonal dots."""

    def kernel(zi_ref, zj_ref, f_ref, pos_ref, diag_ref):
        zi = zi_ref[...].astype(jnp.float32)
        zj = zj_ref[...].astype(jnp.float32)
        # F.normalize(p=2, eps=1e-12): x / max(||x||, 1e-12)
        #   == x * rsqrt(max(||x||^2, 1e-24))   (one EUP op, no divide)
        zi_n = zi * lax.rsqrt(
            jnp.maximum(jnp.sum(zi * zi, axis=-1, keepdims=True), 1e-24))
        zj_n = zj * lax.rsqrt(
            jnp.maximum(jnp.sum(zj * zj, axis=-1, keepdims=True), 1e-24))

        # Single sqrt(1/T)-scaled array used as BOTH matmul operands in pass 2.
        fi = (zi_n * sqrt_inv_t).astype(out_dtype)
        fj = (zj_n * sqrt_inv_t).astype(out_dtype)
        f_ref[0] = fi
        f_ref[1] = fj

        # Positive / diagonal logits from the SAME cast values the MXU will see
        # (difference vs. the MXU path is accumulation order only -> ulps).
        fi32 = fi.astype(jnp.float32)
        fj32 = fj.astype(jnp.float32)
        p = jnp.sum(fi32 * fj32, axis=-1, keepdims=True)   # already includes 1/T
        pos_ref[0] = p
        pos_ref[1] = p
        diag_ref[0] = jnp.sum(fi32 * fi32, axis=-1, keepdims=True)
        diag_ref[1] = jnp.sum(fj32 * fj32, axis=-1, keepdims=True)

    return kernel


def _make_sim_kernel(n, tile_r, tile_c, inv_t, slack):
    """Row-strip kernel: in-kernel column loop over VMEM-resident features."""
    nblk = n // tile_c

    def kernel(lhs_ref, rhs_ref, pos_ref, diag_ref, lse_ref, corr_ref,
               lsum_sc, mneg_sc):
        i = pl.program_id(0)
        lhs = lhs_ref[...]                                   # (tile_r, D)
        row_ids = lax.broadcasted_iota(jnp.int32, (tile_r, 1), 0) + i * tile_r
        c_diag = (i * tile_r) // tile_c   # column block holding the diagonal
                                          # (tile_c == tile_r so it fits in one)

        # No cross-grid-step state: re-init per row strip.
        lsum_sc[...] = jnp.zeros(lsum_sc.shape, jnp.float32)
        mneg_sc[...] = jnp.full(mneg_sc.shape, -1e30, jnp.float32)

        def process_block(c, rhs_blk, col0):
            # (tile_r, D) x (tile_c, D) contracted on the last dims -> (tile_r, tile_c)
            s = lax.dot_general(lhs, rhs_blk, (((1,), (1,)), ((), ())),
                                preferred_element_type=jnp.float32)
            # Constant-shift softmax: |s| <= (1/T)*(1+eps), so exp(s - 1/T)
            # can't overflow and needs no running max / rescale.  The diagonal
            # term is included here and subtracted exactly at finalize.
            lsum_sc[...] += jnp.sum(jnp.exp(s - inv_t), axis=-1, keepdims=True)

            # Off-diagonal row max (accuracy).  Mask cost is paid ONLY on the
            # single block that contains the diagonal.
            @pl.when(c != c_diag)
            def _():
                mneg_sc[...] = jnp.maximum(
                    mneg_sc[...], jnp.max(s, axis=-1, keepdims=True))

            @pl.when(c == c_diag)
            def _():
                col_ids = lax.broadcasted_iota(
                    jnp.int32, (tile_r, tile_c), 1) + col0
                sm = jnp.where(col_ids == row_ids, -1e30, s)
                mneg_sc[...] = jnp.maximum(
                    mneg_sc[...], jnp.max(sm, axis=-1, keepdims=True))

        if nblk == 1:
            process_block(0, rhs_ref[...], 0)
        else:
            @pl.loop(0, nblk)
            def _(c):
                col0 = pl.multiple_of(c * tile_c, tile_c)
                process_block(c, rhs_ref[pl.ds(col0, tile_c), :], col0)

        pos = pos_ref[...]
        # Remove the diagonal contribution from the sum.  diag_ref holds the
        # per-row self-dot of the same cast operands, so this matches the MXU
        # diagonal to accumulation-order ulps (no bf16 bias).
        l_off = lsum_sc[...] - jnp.exp(diag_ref[...] - inv_t)
        l_off = jnp.maximum(l_off, 1e-30)   # guard against pathological underflow
        # Per-row CrossEntropy term: logsumexp(off-diag logits) - positive.
        lse_ref[...] = inv_t + jnp.log(l_off) - pos
        # argmax(logits)==0  <=>  pos >= max(non-diag row)  (ties favor the
        # positive, matching torch.argmax); `slack` absorbs VPU-vs-MXU ulps.
        corr_ref[...] = (pos >= mneg_sc[...] - slack).astype(jnp.float32)

    return kernel


def simclr_loss(z_i, z_j, temperature=0.5, mxu_dtype=jnp.bfloat16):
    """Returns (loss, accuracy) matching SimCLR_Loss.forward.

    mxu_dtype=jnp.bfloat16 (default) runs the similarity matmul on the native
    bf16 MXU path with f32 accumulation (~1e-3 relative logit error).  Pass
    jnp.float32 for a bit-faithful check against an f32 reference.
    """
    B, D = z_i.shape
    assert z_j.shape == (B, D)
    n = 2 * B
    inv_t = float(1.0 / temperature)
    sqrt_inv_t = float(inv_t ** 0.5)
    slack = float(1e-5 * inv_t)

    # ---------------- Pass 1: O(n*D) prep, row-tiled + parallel ----------------
    tb = _pick_tile(B)
    feats2, pos2, diag2 = pl.pallas_call(
        _make_prep_kernel(sqrt_inv_t, mxu_dtype),
        grid=(B // tb,),
        in_specs=[pl.BlockSpec((tb, D), lambda b: (b, 0)),
                  pl.BlockSpec((tb, D), lambda b: (b, 0))],
        out_specs=(pl.BlockSpec((2, tb, D), lambda b: (0, b, 0)),
                   pl.BlockSpec((2, tb, 1), lambda b: (0, b, 0)),
                   pl.BlockSpec((2, tb, 1), lambda b: (0, b, 0))),
        out_shape=(jax.ShapeDtypeStruct((2, B, D), mxu_dtype),    # feats*sqrt(1/T)
                   jax.ShapeDtypeStruct((2, B, 1), jnp.float32),  # positive logit
                   jax.ShapeDtypeStruct((2, B, 1), jnp.float32)), # diagonal logit
        compiler_params=pltpu.CompilerParams(
            dimension_semantics=("parallel",)),
    )(z_i, z_j)

    # (2, B, D) -> (2B, D) is the concat([z_i, z_j]) row order; leading-axis
    # reshapes are layout plumbing only.
    feats = feats2.reshape(n, D)
    pos = pos2.reshape(n, 1)
    diag = diag2.reshape(n, 1)

    # ---------------- Pass 2: O(n^2*D) similarity + logsumexp ----------------
    tile = _pick_tile(n)            # tile_r == tile_c (diag fits one column block)
    itemsize = jnp.dtype(mxu_dtype).itemsize

    lse_minus_pos, correct = pl.pallas_call(
        _make_sim_kernel(n, tile, tile, inv_t, slack),
        grid=(n // tile,),
        in_specs=[
            pl.BlockSpec((tile, D), lambda i: (i, 0)),     # row strip (LHS)
            pl.BlockSpec(memory_space=pltpu.VMEM),         # full feats, VMEM-resident
            pl.BlockSpec((tile, 1), lambda i: (i, 0)),     # positive logit
            pl.BlockSpec((tile, 1), lambda i: (i, 0)),     # diagonal logit
        ],
        out_specs=(pl.BlockSpec((tile, 1), lambda i: (i, 0)),   # lse - pos
                   pl.BlockSpec((tile, 1), lambda i: (i, 0))),  # correct flag
        out_shape=(jax.ShapeDtypeStruct((n, 1), jnp.float32),
                   jax.ShapeDtypeStruct((n, 1), jnp.float32)),
        scratch_shapes=[pltpu.VMEM((tile, 1), jnp.float32),     # running sum(exp)
                        pltpu.VMEM((tile, 1), jnp.float32)],    # running off-diag max
        compiler_params=pltpu.CompilerParams(
            dimension_semantics=("parallel",)),
        cost_estimate=pl.CostEstimate(
            flops=2 * n * n * D,
            transcendentals=n * n,
            bytes_accessed=int(2 * n * D * itemsize + 6 * n * 4)),
    )(feats, feats, pos, diag)

    # Tiny O(n) finish (kept outside so the row-strip axis stays "parallel").
    loss = jnp.sum(lse_minus_pos) / n    # CrossEntropyLoss(reduction='sum') / (2B)
    acc = jnp.sum(correct) / n           # total_correct / (2B)
    # TODO(synk): the PyTorch module returns accuracy via .item() (host sync);
    # here it stays a device scalar.
    return loss, acc


def _reference(z_i, z_j, temperature=0.5):
    # Pure-JAX transcription of the PyTorch forward for verification.
    B = z_i.shape[0]
    n = 2 * B
    feats = jnp.concatenate([z_i, z_j], axis=0).astype(jnp.float32)
    norm = jnp.sqrt(jnp.sum(feats * feats, axis=-1, keepdims=True))
    feats = feats / jnp.maximum(norm, 1e-12)
    logits = (feats @ feats.T) / temperature
    idx = jnp.arange(n)
    pos = logits[idx, (idx + B) % n]
    diag = jnp.eye(n, dtype=bool)
    off = jnp.where(diag, -jnp.inf, logits)
    lse = jax.scipy.special.logsumexp(off, axis=-1)
    loss = jnp.sum(lse - pos) / n
    pos_mask = idx[None, :] == ((idx + B) % n)[:, None]
    negs = jnp.where(diag | pos_mask, -jnp.inf, logits)
    correct = jnp.sum(pos >= jnp.max(negs, axis=-1))
    return loss, correct / n


if __name__ == "__main__":
    key = jax.random.PRNGKey(0)
    k1, k2 = jax.random.split(key)
    B, D = 8, 32
    z_i = jax.random.normal(k1, (B, D), dtype=jnp.float32)
    z_j = jax.random.normal(k2, (B, D), dtype=jnp.float32)

    ref_loss, ref_acc = _reference(z_i, z_j, temperature=0.5)

    # f32-operand path: tight check against the f32 reference.
    loss32, acc32 = simclr_loss(z_i, z_j, temperature=0.5, mxu_dtype=jnp.float32)
    jax.block_until_ready((loss32, acc32))
    assert jnp.allclose(loss32, ref_loss, rtol=1e-4, atol=1e-4), (loss32, ref_loss)
    assert jnp.allclose(acc32, ref_acc, atol=1e-6), (acc32, ref_acc)

    # Default fast path (bf16 MXU operands, f32 accumulation): loose check.
    loss16, acc16 = simclr_loss(z_i, z_j, temperature=0.5)
    jax.block_until_ready((loss16, acc16))
    assert jnp.allclose(loss16, ref_loss, rtol=5e-2, atol=5e-2), (loss16, ref_loss)
    assert abs(float(acc16) - float(ref_acc)) <= 2.0 / (2 * B) + 1e-6, (acc16, ref_acc)

    print("KERNEL_OK")
</pallas_src>

<mosaic_0001>
module attributes {stable_mosaic.version = 11 : i64} {
  func.func @kernel(%arg0: i32, %arg1: memref<8x32xf32, #tpu.memory_space<vmem>>, %arg2: memref<8x32xf32, #tpu.memory_space<vmem>>, %arg3: memref<2x8x32xf32, #tpu.memory_space<vmem>>, %arg4: memref<2x8x1xf32, #tpu.memory_space<vmem>>, %arg5: memref<2x8x1xf32, #tpu.memory_space<vmem>>) attributes {dimension_semantics = [#tpu.dimension_semantics<parallel>], iteration_bounds = array<i64: 1>, scalar_prefetch = 0 : i64, scratch_operands = 0 : i64, tpu.core_type = #tpu.core_type<tc>, window_params = [{transform_indices = @transform_0, window_bounds = array<i64: 8, 32>}, {transform_indices = @transform_1, window_bounds = array<i64: 8, 32>}, {transform_indices = @transform_2, window_bounds = array<i64: 2, 8, 32>}, {transform_indices = @transform_3, window_bounds = array<i64: 2, 8, 1>}, {transform_indices = @transform_4, window_bounds = array<i64: 2, 8, 1>}]} {
    %c0 = arith.constant 0 : index
    %c0_0 = arith.constant 0 : index
    %0 = vector.load %arg1[%c0, %c0_0] : memref<8x32xf32, #tpu.memory_space<vmem>>, vector<8x32xf32>
    %c0_1 = arith.constant 0 : index
    %c0_2 = arith.constant 0 : index
    %1 = vector.load %arg2[%c0_1, %c0_2] : memref<8x32xf32, #tpu.memory_space<vmem>>, vector<8x32xf32>
    %2 = arith.mulf %0, %0 : vector<8x32xf32>
    %cst = arith.constant dense<0.000000e+00> : vector<8xf32>
    %3 = vector.multi_reduction <add>, %2, %cst [1] : vector<8x32xf32> to vector<8xf32>
    %4 = vector.shape_cast %3 : vector<8xf32> to vector<8x1xf32>
    %cst_3 = arith.constant 1.000000e-24 : f32
    %5 = vector.broadcast %cst_3 : f32 to vector<8x1xf32>
    %6 = arith.maximumf %4, %5 : vector<8x1xf32>
    %7 = math.rsqrt %6 : vector<8x1xf32>
    %8 = vector.broadcast %7 : vector<8x1xf32> to vector<8x32xf32>
    %9 = arith.mulf %0, %8 : vector<8x32xf32>
    %10 = arith.mulf %1, %1 : vector<8x32xf32>
    %cst_4 = arith.constant dense<0.000000e+00> : vector<8xf32>
    %11 = vector.multi_reduction <add>, %10, %cst_4 [1] : vector<8x32xf32> to vector<8xf32>
    %12 = vector.shape_cast %11 : vector<8xf32> to vector<8x1xf32>
    %cst_5 = arith.constant 1.000000e-24 : f32
    %13 = vector.broadcast %cst_5 : f32 to vector<8x1xf32>
    %14 = arith.maximumf %12, %13 : vector<8x1xf32>
    %15 = math.rsqrt %14 : vector<8x1xf32>
    %16 = vector.broadcast %15 : vector<8x1xf32> to vector<8x32xf32>
    %17 = arith.mulf %1, %16 : vector<8x32xf32>
    %cst_6 = arith.constant 1.41421354 : f32
    %18 = vector.broadcast %cst_6 : f32 to vector<8x32xf32>
    %19 = arith.mulf %9, %18 : vector<8x32xf32>
    %cst_7 = arith.constant 1.41421354 : f32
    %20 = vector.broadcast %cst_7 : f32 to vector<8x32xf32>
    %21 = arith.mulf %17, %20 : vector<8x32xf32>
    %c0_8 = arith.constant 0 : index
    %c0_9 = arith.constant 0 : index
    %c0_10 = arith.constant 0 : index
    %22 = vector.load %arg3[%c0_8, %c0_9, %c0_10] : memref<2x8x32xf32, #tpu.memory_space<vmem>>, vector<1x8x32xf32>
    %23 = vector.shape_cast %22 : vector<1x8x32xf32> to vector<8x32xf32>
    %24 = vector.shape_cast %19 : vector<8x32xf32> to vector<1x8x32xf32>
    tpu.vector_store %arg3[%c0_8, %c0_9, %c0_10], %24 {strides = array<i32>} : memref<2x8x32xf32, #tpu.memory_space<vmem>>, vector<1x8x32xf32>,
    %c1 = arith.constant 1 : index
    %c0_11 = arith.constant 0 : index
    %c0_12 = arith.constant 0 : index
    %25 = vector.load %arg3[%c1, %c0_11, %c0_12] : memref<2x8x32xf32, #tpu.memory_space<vmem>>, vector<1x8x32xf32>
    %26 = vector.shape_cast %25 : vector<1x8x32xf32> to vector<8x32xf32>
    %27 = vector.shape_cast %21 : vector<8x32xf32> to vector<1x8x32xf32>
    tpu.vector_store %arg3[%c1, %c0_11, %c0_12], %27 {strides = array<i32>} : memref<2x8x32xf32, #tpu.memory_space<vmem>>, vector<1x8x32xf32>,
    %28 = arith.mulf %19, %21 : vector<8x32xf32>
    %cst_13 = arith.constant dense<0.000000e+00> : vector<8xf32>
    %29 = vector.multi_reduction <add>, %28, %cst_13 [1] : vector<8x32xf32> to vector<8xf32>
    %30 = vector.shape_cast %29 : vector<8xf32> to vector<8x1xf32>
    %c0_14 = arith.constant 0 : index
    %c0_15 = arith.constant 0 : index
    %c0_16 = arith.constant 0 : index
    %31 = vector.load %arg4[%c0_14, %c0_15, %c0_16] : memref<2x8x1xf32, #tpu.memory_space<vmem>>, vector<1x8x1xf32>
    %32 = vector.shape_cast %31 : vector<1x8x1xf32> to vector<8x1xf32>
    %33 = vector.shape_cast %30 : vector<8x1xf32> to vector<1x8x1xf32>
    tpu.vector_store %arg4[%c0_14, %c0_15, %c0_16], %33 {strides = array<i32>} : memref<2x8x1xf32, #tpu.memory_space<vmem>>, vector<1x8x1xf32>,
    %c1_17 = arith.constant 1 : index
    %c0_18 = arith.constant 0 : index
    %c0_19 = arith.constant 0 : index
    %34 = vector.load %arg4[%c1_17, %c0_18, %c0_19] : memref<2x8x1xf32, #tpu.memory_space<vmem>>, vector<1x8x1xf32>
    %35 = vector.shape_cast %34 : vector<1x8x1xf32> to vector<8x1xf32>
    %36 = vector.shape_cast %30 : vector<8x1xf32> to vector<1x8x1xf32>
    tpu.vector_store %arg4[%c1_17, %c0_18, %c0_19], %36 {strides = array<i32>} : memref<2x8x1xf32, #tpu.memory_space<vmem>>, vector<1x8x1xf32>,
    %37 = arith.mulf %19, %19 : vector<8x32xf32>
    %cst_20 = arith.constant dense<0.000000e+00> : vector<8xf32>
    %38 = vector.multi_reduction <add>, %37, %cst_20 [1] : vector<8x32xf32> to vector<8xf32>
    %39 = vector.shape_cast %38 : vector<8xf32> to vector<8x1xf32>
    %c0_21 = arith.constant 0 : index
    %c0_22 = arith.constant 0 : index
    %c0_23 = arith.constant 0 : index
    %40 = vector.load %arg5[%c0_21, %c0_22, %c0_23] : memref<2x8x1xf32, #tpu.memory_space<vmem>>, vector<1x8x1xf32>
    %41 = vector.shape_cast %40 : vector<1x8x1xf32> to vector<8x1xf32>
    %42 = vector.shape_cast %39 : vector<8x1xf32> to vector<1x8x1xf32>
    tpu.vector_store %arg5[%c0_21, %c0_22, %c0_23], %42 {strides = array<i32>} : memref<2x8x1xf32, #tpu.memory_space<vmem>>, vector<1x8x1xf32>,
    %43 = arith.mulf %21, %21 : vector<8x32xf32>
    %cst_24 = arith.constant dense<0.000000e+00> : vector<8xf32>
    %44 = vector.multi_reduction <add>, %43, %cst_24 [1] : vector<8x32xf32> to vector<8xf32>
    %45 = vector.shape_cast %44 : vector<8xf32> to vector<8x1xf32>
    %c1_25 = arith.constant 1 : index
    %c0_26 = arith.constant 0 : index
    %c0_27 = arith.constant 0 : index
    %46 = vector.load %arg5[%c1_25, %c0_26, %c0_27] : memref<2x8x1xf32, #tpu.memory_space<vmem>>, vector<1x8x1xf32>
    %47 = vector.shape_cast %46 : vector<1x8x1xf32> to vector<8x1xf32>
    %48 = vector.shape_cast %45 : vector<8x1xf32> to vector<1x8x1xf32>
    tpu.vector_store %arg5[%c1_25, %c0_26, %c0_27], %48 {strides = array<i32>} : memref<2x8x1xf32, #tpu.memory_space<vmem>>, vector<1x8x1xf32>,
    return
  }
  func.func @transform_0(%arg0: i32) -> (i32, i32) {
    %c0_i32 = arith.constant 0 : i32
    %c0_i32_0 = arith.constant 0 : i32
    return %arg0, %c0_i32 : i32, i32
  }
  func.func @transform_1(%arg0: i32) -> (i32, i32) {
    %c0_i32 = arith.constant 0 : i32
    %c0_i32_0 = arith.constant 0 : i32
    return %arg0, %c0_i32 : i32, i32
  }
  func.func @transform_2(%arg0: i32) -> (i32, i32, i32) {
    %c0_i32 = arith.constant 0 : i32
    %c0_i32_0 = arith.constant 0 : i32
    %c0_i32_1 = arith.constant 0 : i32
    return %c0_i32, %arg0, %c0_i32_0 : i32, i32, i32
  }
  func.func @transform_3(%arg0: i32) -> (i32, i32, i32) {
    %c0_i32 = arith.constant 0 : i32
    %c0_i32_0 = arith.constant 0 : i32
    %c0_i32_1 = arith.constant 0 : i32
    return %c0_i32, %arg0, %c0_i32_0 : i32, i32, i32
  }
  func.func @transform_4(%arg0: i32) -> (i32, i32, i32) {
    %c0_i32 = arith.constant 0 : i32
    %c0_i32_0 = arith.constant 0 : i32
    %c0_i32_1 = arith.constant 0 : i32
    return %c0_i32, %arg0, %c0_i32_0 : i32, i32, i32
  }
}

</mosaic_0001>

<llo_original>
// kernel: tpu_custom_call.1
$region0: #{tpu_custom_call.1}
  #allocation0 [shape = 'u32[]', space=smem, size = 0x4, offset = 0x4, fixed_abs, tag = 'smem constant byte address 0x4 - core index']
  #allocation1 [shape = 'u32[144,128]{1,0:T(1,128)}', space=vmem, size = 0x12000, scoped, tag = 'internal scratch']
  %s0 = inlined_call_operand.hbm [shape: f32[8,32], index: 0, kind: input, shape index: {}]
  %s1 = inlined_call_operand.hbm [shape: f32[8,32], index: 1, kind: input, shape index: {}]
  %s2 = inlined_call_operand.hbm [shape: f32[2,8,32], index: 2, kind: output, shape index: {0}]
  %s3 = inlined_call_operand.vmem [shape: f32[2,8,1], index: 3, kind: output, shape index: {1}]
  %s4 = inlined_call_operand.vmem [shape: f32[2,8,1], index: 4, kind: output, shape index: {2}]
  %5 = xla_tuple %s2, %s3, %s4
  %s6 = sld [smem:[#allocation0]]
  $region42: #{tpu_custom_call.1} parent=0
    _
  %s8 = ssub.s32 1, %s6
  %s9 = scalar_select 0, %s8, %s6
  $region1: #{tpu_custom_call.1} parent=0
    #allocation2 [shape = 'u8[4096]{0}', space=vmem, size = 0x1000, scoped, tag = 'input window, operand 0, single buffered']
    #allocation3 [shape = 's32[1]{0}', space=sflag, size = 0x4, scoped, tag = 'scoped memory for tpu_custom_call.1']
    #allocation4 [shape = 's32[1]{0}', space=sflag, size = 0x4, scoped, tag = 'scoped memory for tpu_custom_call.1']
    #allocation5 [shape = 'u8[4096]{0}', space=vmem, size = 0x1000, scoped, tag = 'input window, operand 1, single buffered']
    #allocation6 [shape = 's32[1]{0}', space=sflag, size = 0x4, scoped, tag = 'scoped memory for tpu_custom_call.1']
    #allocation7 [shape = 'u8[8192]{0}', space=vmem, size = 0x2000, scoped, tag = 'output window, operand 0, single buffered']
    %10 = vsyncpa [#allocation3], 0
    %11 = vsyncpa [#allocation6], 0
    %12 = vsyncpa [#allocation4], 0
    // Predicated region
    $region2: #{tpu_custom_call.1} parent=1 // pred_check
      _
    $region3: #{tpu_custom_call.1} parent=1 // pred_check_branch
      %14 = sbr.rel (0) target = $region5
    $region4: #{tpu_custom_call.1} parent=1 // pred_region
      %s16 = ssub.s32 128, 128
      %17 = vsyncadd [#allocation3], %s16
      %s19 = sshll.u32 [#allocation2], 4
      %s20 = int_to_ptr.vmem [resolvable:$true] %s19
      %22 = dma.hbm_to_vmem [thread:$0]  %s0, 128, %s20, [#allocation3]
    $region5: #{tpu_custom_call.1} parent=1 // pred_fallthru
      _
    // Predicated region
    $region6: #{tpu_custom_call.1} parent=1 // pred_check
      _
    $region7: #{tpu_custom_call.1} parent=1 // pred_check_branch
      %24 = sbr.rel (0) target = $region9
    $region8: #{tpu_custom_call.1} parent=1 // pred_region
      %s26 = ssub.s32 128, 128
      %27 = vsyncadd [#allocation6], %s26
      %s29 = sshll.u32 [#allocation5], 4
      %s30 = int_to_ptr.vmem [resolvable:$true] %s29
      %32 = dma.hbm_to_vmem [thread:$0]  %s1, 128, %s30, [#allocation6]
    $region9: #{tpu_custom_call.1} parent=1 // pred_fallthru
      _
    // Predicated region
    $region10: #{tpu_custom_call.1} parent=1 // pred_check
      _
    $region11: #{tpu_custom_call.1} parent=1 // pred_check_branch
      %34 = sbr.rel (0) target = $region13
    $region12: #{tpu_custom_call.1} parent=1 // pred_region
      %35 = dma.done [#allocation3], 128
    $region13: #{tpu_custom_call.1} parent=1 // pred_fallthru
      _
    // Predicated region
    $region14: #{tpu_custom_call.1} parent=1 // pred_check
      _
    $region15: #{tpu_custom_call.1} parent=1 // pred_check_branch
      %37 = sbr.rel (0) target = $region17
    $region16: #{tpu_custom_call.1} parent=1 // pred_region
      %38 = dma.done [#allocation6], 128
    $region17: #{tpu_custom_call.1} parent=1 // pred_fallthru
      _
    %v39 = vld [vmem:[#allocation2] sm:$0xff]
    %v40 = vld [vmem:[#allocation5] sm:$0xff]
    %v41 = vmul.f32 %v39, %v39
    %vm42 = vcmask 261120
    %v43 = vsel %vm42, %v41, 0.0
    %44 = vadd.xlane.f32.xlu0 %v43
    %v45 = vpop.xlane.xlu0 %44
    %v46 = vmax.f32 %v45, 1e-24
    %v47 = vrsqrt.pop %v46
    %v48 = vmul.f32 %v39, %v47
    %v49 = vmul.f32 %v40, %v40
    %v50 = vsel %vm42, %v49, 0.0
    %51 = vadd.xlane.f32.xlu0 %v50
    %v52 = vpop.xlane.xlu0 %51
    %v53 = vmax.f32 %v52, 1e-24
    %v54 = vrsqrt.pop %v53
    %v55 = vmul.f32 %v40, %v54
    %v56 = vmul.f32 %v48, 1.4142135
    %v57 = vmul.f32 %v55, 1.4142135
    %58 = vst.msk [vmem:[#allocation7] sm:$0xff] %vm42, %v56
    %s59 = scalar_lea.vmem [#allocation7], 8
    %60 = vst.msk [vmem:[%s59] sm:$0xff] %vm42, %v57
    %v61 = vmul.f32 %v56, %v57
    %v62 = vsel %vm42, %v61, 0.0
    %63 = vadd.xlane.f32.xlu0 %v62
    %v64 = vpop.xlane.xlu0 %63
    %vm65 = vcmask 7168
    %66 = vst.msk [vmem:[%s3] sm:$0xff] %vm65, %v64
    %s67 = scalar_lea.vmem %s3, 8
    %68 = vst.msk [vmem:[%s67] sm:$0xff] %vm65, %v64
    %v69 = vmul.f32 %v56, %v56
    %v70 = vsel %vm42, %v69, 0.0
    %71 = vadd.xlane.f32.xlu0 %v70
    %v72 = vpop.xlane.xlu0 %71
    %73 = vst.msk [vmem:[%s4] sm:$0xff] %vm65, %v72
    %v74 = vmul.f32 %v57, %v57
    %v75 = vsel %vm42, %v74, 0.0
    %76 = vadd.xlane.f32.xlu0 %v75
    %v77 = vpop.xlane.xlu0 %76
    %s78 = scalar_lea.vmem %s4, 8
    %79 = vst.msk [vmem:[%s78] sm:$0xff] %vm65, %v77
    // Predicated region
    $region18: #{tpu_custom_call.1} parent=1 // pred_check
      _
    $region19: #{tpu_custom_call.1} parent=1 // pred_check_branch
      %81 = sbr.rel (0) target = $region21
    $region20: #{tpu_custom_call.1} parent=1 // pred_region
      %s83 = ssub.s32 256, 256
      %84 = vsyncadd [#allocation4], %s83
      %s85 = sshll.u32 [#allocation7], 4
      %s86 = int_to_ptr.vmem [resolvable:$true] %s85
      %91 = dma.vmem_to_hbm [thread:$0]  %s86, 256, %s2, [#allocation4], 128, 128, 8
    $region21: #{tpu_custom_call.1} parent=1 // pred_fallthru
      _
    // Predicated region
    $region22: #{tpu_custom_call.1} parent=1 // pred_check
      _
    $region23: #{tpu_custom_call.1} parent=1 // pred_check_branch
      %93 = sbr.rel (0) target = $region25
    $region24: #{tpu_custom_call.1} parent=1 // pred_region
      _
    $region25: #{tpu_custom_call.1} parent=1 // pred_fallthru
      _
    // Predicated region
    $region26: #{tpu_custom_call.1} parent=1 // pred_check
      _
    $region27: #{tpu_custom_call.1} parent=1 // pred_check_branch
      %95 = sbr.rel (0) target = $region29
    $region28: #{tpu_custom_call.1} parent=1 // pred_region
      _
    $region29: #{tpu_custom_call.1} parent=1 // pred_fallthru
      _
    // Predicated region
    $region30: #{tpu_custom_call.1} parent=1 // pred_check
      _
    $region31: #{tpu_custom_call.1} parent=1 // pred_check_branch
      %97 = sbr.rel (0) target = $region33
    $region32: #{tpu_custom_call.1} parent=1 // pred_region
      %98 = dma.done [#allocation4], 256
    $region33: #{tpu_custom_call.1} parent=1 // pred_fallthru
      _
    // Predicated region
    $region34: #{tpu_custom_call.1} parent=1 // pred_check
      _
    $region35: #{tpu_custom_call.1} parent=1 // pred_check_branch
      %100 = sbr.rel (0) target = $region37
    $region36: #{tpu_custom_call.1} parent=1 // pred_region
      _
    $region37: #{tpu_custom_call.1} parent=1 // pred_fallthru
      _
    // Predicated region
    $region38: #{tpu_custom_call.1} parent=1 // pred_check
      _
    $region39: #{tpu_custom_call.1} parent=1 // pred_check_branch
      %102 = sbr.rel (0) target = $region41
    $region40: #{tpu_custom_call.1} parent=1 // pred_region
      _
    $region41: #{tpu_custom_call.1} parent=1 // pred_fallthru
      _
    %103 = vsyncpa [#allocation3], 1
    %104 = vsyncpa [#allocation6], 1
    %105 = vsyncpa [#allocation4], 1

</llo_original>
